<compile_context>
chip_gen: v5e
topology: v5e:2x2
jax: 0.10.0
libtpu: 0.0.40
codegen_flags: <defaults>
</compile_context>

<pallas_src>
import functools
import math

import jax
import jax.numpy as jnp
from jax.experimental import pallas as pl
from jax.experimental.pallas import tpu as pltpu


# ---------------------------------------------------------------------------
# Sizing / VMEM accounting.
#
# Per grid step roughly:   2x input block (double-buffered DMA)
#                        + 2x output block (double-buffered DMA)
#                        + ~4x f32 intermediates (x_f32, x*x, rolled copies, ...)
# so the per-block *element* budget below (~2 MiB of f32 per I/O block) keeps
# total live VMEM well under the 32 MiB scoped limit on every generation
# (v7x has only 64 MiB physical VMEM).  2 MiB blocks are already >=85% of the
# HBM roofline, so bigger blocks buy nothing for this mem-bound kernel.
# ---------------------------------------------------------------------------
_BLOCK_ELEMS = 512 * 1024                  # elements per I/O block (~2 MiB f32)
_VMEM_LIMIT_BYTES = 32 * 1024 * 1024       # safe on v5e / v6e / v7x


def _round_up(x, m):
    return ((x + m - 1) // m) * m


@functools.lru_cache(maxsize=None)
def _roll_matches_numpy():
    """True iff pltpu.roll follows jnp.roll semantics (out[i] = in[i - shift]).

    Probed once so the packed kernel's segment-broadcast mask polarity is
    correct regardless of the rotate convention of the toolchain.
    """
    def kernel(x_ref, o_ref):
        o_ref[...] = pltpu.roll(x_ref[...], 1, axis=1)

    with jax.ensure_compile_time_eval():
        x = jax.lax.broadcasted_iota(jnp.int32, (8, 128), 1)
        out = pl.pallas_call(
            kernel, out_shape=jax.ShapeDtypeStruct((8, 128), jnp.int32))(x)
        return bool(out[0, 0] == 127)


# ---------------------------------------------------------------------------
# channels_last, small power-of-two C: lane-packed (R*C/128, 128) view.
# ---------------------------------------------------------------------------
def _ln_packed_kernel(x_ref, w_ref, b_ref, o_ref, *, eps, c, inv_c, numpy_roll):
    """Each 128-lane row packs 128//c independent length-c rows.

    Segment statistics use a log2(c) roll+add tree (exact f32) followed by a
    log2(c) roll+select broadcast, so both loads and stores stay lane-dense.
    Overhang rows of a partial tail block are garbage but never stored.
    """
    x = x_ref[...].astype(jnp.float32)                  # (tm, 128)
    lw = x.shape[-1]
    s1 = x
    s2 = x * x

    # Reduction tree: each lane accumulates c consecutive lanes (XLU slot).
    k = 1
    while k < c:
        s1 = s1 + pltpu.roll(s1, k, axis=1)
        s2 = s2 + pltpu.roll(s2, k, axis=1)
        k *= 2

    # The exact segment sum now sits at one end of every c-lane segment
    # (which end depends on the rotate convention); broadcast it to all lanes.
    lane = jax.lax.broadcasted_iota(jnp.int32, x.shape, 1)
    k = c // 2
    while k >= 1:
        moved1 = pltpu.roll(s1, lw - k, axis=1)
        moved2 = pltpu.roll(s2, lw - k, axis=1)
        bit_clear = (lane & k) == 0
        take = bit_clear if numpy_roll else jnp.logical_not(bit_clear)
        s1 = jnp.where(take, moved1, s1)
        s2 = jnp.where(take, moved2, s2)
        k //= 2

    mean = s1 * inv_c
    var = s2 * inv_c - mean * mean                      # biased variance
    inv = jax.lax.rsqrt(var + eps)                      # EUP
    w = w_ref[...]                                      # (1, 128) tiled weight
    b = b_ref[...]
    scale = inv * w
    o_ref[...] = (x * scale + (b - mean * scale)).astype(o_ref.dtype)


# ---------------------------------------------------------------------------
# channels_last, generic C: (tm, C) blocks, reduce over lanes.
# ---------------------------------------------------------------------------
def _ln_lastdim_kernel(x_ref, w_ref, b_ref, o_ref, *, eps, inv_c):
    x = x_ref[...].astype(jnp.float32)                  # (tm, C)
    s1 = jnp.sum(x, axis=-1, keepdims=True) * inv_c     # mean
    s2 = jnp.sum(x * x, axis=-1, keepdims=True) * inv_c
    var = s2 - s1 * s1                                  # biased variance
    inv = jax.lax.rsqrt(var + eps)
    w = w_ref[...]                                      # (1, C)
    b = b_ref[...]
    scale = inv * w
    o_ref[...] = (x * scale + (b - s1 * scale)).astype(o_ref.dtype)


# ---------------------------------------------------------------------------
# channels_first: (nb, C, ts) blocks, reduce over the channel (sublane) axis,
# spatial stays on lanes -> lane-dense, no transposes.
# ---------------------------------------------------------------------------
def _ln_cfirst_kernel(x_ref, w_ref, b_ref, o_ref, *, eps, inv_c):
    x = x_ref[...].astype(jnp.float32)                  # (nb, C, ts)
    s1 = jnp.sum(x, axis=1, keepdims=True) * inv_c      # (nb, 1, ts)
    s2 = jnp.sum(x * x, axis=1, keepdims=True) * inv_c
    var = s2 - s1 * s1                                  # biased variance
    inv = jax.lax.rsqrt(var + eps)
    w = w_ref[...]                                      # (1, C, 1)
    b = b_ref[...]
    scale = inv * w                                     # (nb, C, ts)
    o_ref[...] = (x * scale + (b - s1 * scale)).astype(o_ref.dtype)


# ---------------------------------------------------------------------------
# Wrappers.
# ---------------------------------------------------------------------------
def _layernorm_channels_last(x, weight, bias, eps):
    C = x.shape[-1]
    R = math.prod(x.shape[:-1]) if x.ndim > 1 else 1
    total = R * C
    inv_c = 1.0 / C

    is_pow2 = C >= 1 and (C & (C - 1)) == 0
    if is_pow2 and C <= 32 and total % 128 == 0:
        # -------- lane-packed path: free reshape to (R*C/128, 128) ----------
        reps = 128 // C
        Rp = total // 128
        x2d = x.reshape(Rp, 128)
        w_t = jnp.tile(weight.astype(jnp.float32).reshape(1, C), (1, reps))
        b_t = jnp.tile(bias.astype(jnp.float32).reshape(1, C), (1, reps))

        tm = max(8, (_BLOCK_ELEMS // 128) // 8 * 8)     # budget-sized, no cap
        if tm >= Rp:
            tm = Rp
        # v7x has two TensorCores: make sure the parallel grid has >= 2 steps.
        if Rp > 8 and pl.cdiv(Rp, tm) < 2:
            tm = min(tm, max(8, _round_up(pl.cdiv(Rp, 2), 8)))
        grid = (pl.cdiv(Rp, tm),)                       # masked partial tail

        kernel = functools.partial(
            _ln_packed_kernel, eps=eps, c=C, inv_c=inv_c,
            numpy_roll=_roll_matches_numpy())
        y2d = pl.pallas_call(
            kernel,
            out_shape=jax.ShapeDtypeStruct((Rp, 128), x.dtype),
            grid_spec=pltpu.PrefetchScalarGridSpec(
                num_scalar_prefetch=0,
                grid=grid,
                in_specs=[
                    pl.BlockSpec((tm, 128), lambda i: (i, 0)),
                    pl.BlockSpec((1, 128), lambda i: (0, 0)),   # resident
                    pl.BlockSpec((1, 128), lambda i: (0, 0)),
                ],
                out_specs=pl.BlockSpec((tm, 128), lambda i: (i, 0)),
            ),
            compiler_params=pltpu.CompilerParams(
                dimension_semantics=("parallel",),
                vmem_limit_bytes=_VMEM_LIMIT_BYTES,
            ),
        )(x2d, w_t, b_t)
        return y2d.reshape(x.shape)

    # -------- generic path: (tm, C) blocks (for C>=96 this is already -------
    # -------- >=75% lane-dense; the packed path covers the tiny-C case) -----
    x2d = x.reshape(R, C)
    lane_c = _round_up(C, 128)                 # padded lane footprint in VMEM
    tm = max(8, (_BLOCK_ELEMS // lane_c) // 8 * 8)
    if tm >= R:
        tm = R
    if R > 8 and pl.cdiv(R, tm) < 2:
        tm = min(tm, max(8, _round_up(pl.cdiv(R, 2), 8)))
    grid = (pl.cdiv(R, tm),)

    w2d = weight.astype(jnp.float32).reshape(1, C)
    b2d = bias.astype(jnp.float32).reshape(1, C)
    kernel = functools.partial(_ln_lastdim_kernel, eps=eps, inv_c=inv_c)
    y2d = pl.pallas_call(
        kernel,
        out_shape=jax.ShapeDtypeStruct((R, C), x.dtype),
        grid_spec=pltpu.PrefetchScalarGridSpec(
            num_scalar_prefetch=0,
            grid=grid,
            in_specs=[
                pl.BlockSpec((tm, C), lambda i: (i, 0)),
                pl.BlockSpec((1, C), lambda i: (0, 0)),
                pl.BlockSpec((1, C), lambda i: (0, 0)),
            ],
            out_specs=pl.BlockSpec((tm, C), lambda i: (i, 0)),
        ),
        compiler_params=pltpu.CompilerParams(
            dimension_semantics=("parallel",),
            vmem_limit_bytes=_VMEM_LIMIT_BYTES,
        ),
    )(x2d, w2d, b2d)
    return y2d.reshape(x.shape)


def _layernorm_channels_first(x, weight, bias, eps):
    N, C = x.shape[0], x.shape[1]
    S = math.prod(x.shape[2:]) if x.ndim > 2 else 1
    x3d = x.reshape(N, C, S)                   # free reshape (contiguous NCHW)
    inv_c = 1.0 / C
    itemsize = jnp.dtype(x.dtype).itemsize

    c_pad = _round_up(C, 8)                    # sublane padding in VMEM
    per_image = c_pad * S                      # padded elements per batch item
    min_ts = max(128, _round_up(512 // itemsize, 128))  # >=512 B DMA segments

    if per_image <= _BLOCK_ELEMS:
        # Whole (C, S) planes are small: batch several images per block to
        # amortize the ~0.35 us per-grid-step overhead.
        nb = max(1, min(N, _BLOCK_ELEMS // per_image))
        ts = S
    else:
        nb = 1
        ts = max(min_ts, (_BLOCK_ELEMS // c_pad) // 128 * 128)
        if ts >= S:
            ts = S

    # v7x has two TensorCores: prefer a grid with >= 2 parallel steps.
    if pl.cdiv(N, nb) * pl.cdiv(S, ts) < 2:
        if N > 1:
            nb = pl.cdiv(N, 2)
        elif ts == S and S >= 2 * min_ts:
            ts = _round_up(pl.cdiv(S, 2), 128)

    grid = (pl.cdiv(N, nb), pl.cdiv(S, ts))    # masked partial tails

    w3d = weight.astype(jnp.float32).reshape(1, C, 1)
    b3d = bias.astype(jnp.float32).reshape(1, C, 1)
    kernel = functools.partial(_ln_cfirst_kernel, eps=eps, inv_c=inv_c)
    y3d = pl.pallas_call(
        kernel,
        out_shape=jax.ShapeDtypeStruct((N, C, S), x.dtype),
        grid_spec=pltpu.PrefetchScalarGridSpec(
            num_scalar_prefetch=0,
            grid=grid,
            in_specs=[
                pl.BlockSpec((nb, C, ts), lambda n, s: (n, 0, s)),
                pl.BlockSpec((1, C, 1), lambda n, s: (0, 0, 0)),   # resident
                pl.BlockSpec((1, C, 1), lambda n, s: (0, 0, 0)),
            ],
            out_specs=pl.BlockSpec((nb, C, ts), lambda n, s: (n, 0, s)),
        ),
        compiler_params=pltpu.CompilerParams(
            dimension_semantics=("parallel", "parallel"),
            vmem_limit_bytes=_VMEM_LIMIT_BYTES,
        ),
    )(x3d, w3d, b3d)
    return y3d.reshape(x.shape)


# ---------------------------------------------------------------------------
# Public wrapper matching the PyTorch module's forward.
# ---------------------------------------------------------------------------
def layer_norm(x, weight, bias, eps=1e-6, data_format="channels_last"):
    if data_format == "channels_last":
        return _layernorm_channels_last(x, weight, bias, eps)
    elif data_format == "channels_first":
        return _layernorm_channels_first(x, weight, bias, eps)
    else:
        raise NotImplementedError(data_format)


# ---------------------------------------------------------------------------
# Pure-JAX reference (mirrors the PyTorch forward).
# ---------------------------------------------------------------------------
def _reference(x, weight, bias, eps, data_format):
    if data_format == "channels_last":
        u = x.mean(-1, keepdims=True)
        s = ((x - u) ** 2).mean(-1, keepdims=True)
        return (x - u) / jnp.sqrt(s + eps) * weight + bias
    else:
        u = x.mean(1, keepdims=True)
        s = ((x - u) ** 2).mean(1, keepdims=True)
        xn = (x - u) / jnp.sqrt(s + eps)
        return weight[None, :, None, None] * xn + bias[None, :, None, None]


if __name__ == "__main__":
    key = jax.random.PRNGKey(0)
    k1, k2, k3, k4, k5 = jax.random.split(key, 5)

    C = 4
    eps = 1e-6
    # Module init is ones/zeros; perturb deterministically so the affine path
    # is actually exercised.
    weight = jnp.ones((C,), jnp.float32) + 0.1 * jax.random.normal(k3, (C,))
    bias = jnp.zeros((C,), jnp.float32) + 0.1 * jax.random.normal(k4, (C,))

    # channels_first: NCHW input (as used inside the ConvNeXt FPN).
    x_cf = jax.random.normal(k1, (2, C, 16, 16), jnp.float32)
    y_cf = layer_norm(x_cf, weight, bias, eps, data_format="channels_first")
    y_cf = jax.block_until_ready(y_cf)
    ref_cf = _reference(x_cf, weight, bias, eps, "channels_first")

    # channels_last: NHWC input (exercises the lane-packed path, C=4).
    x_cl = jax.random.normal(k2, (2, 16, 16, C), jnp.float32)
    y_cl = layer_norm(x_cl, weight, bias, eps, data_format="channels_last")
    y_cl = jax.block_until_ready(y_cl)
    ref_cl = _reference(x_cl, weight, bias, eps, "channels_last")

    # channels_last, non-power-of-two C (exercises the generic fallback path).
    Cg = 6
    wg = jnp.ones((Cg,), jnp.float32) + 0.1 * jax.random.normal(k5, (Cg,))
    bg = jnp.zeros((Cg,), jnp.float32) + 0.05 * jax.random.normal(k3, (Cg,))
    x_g = jax.random.normal(k4, (2, 5, 7, Cg), jnp.float32)
    y_g = layer_norm(x_g, wg, bg, eps, data_format="channels_last")
    y_g = jax.block_until_ready(y_g)
    ref_g = _reference(x_g, wg, bg, eps, "channels_last")

    assert y_cf.shape == x_cf.shape and y_cf.dtype == x_cf.dtype
    assert y_cl.shape == x_cl.shape and y_cl.dtype == x_cl.dtype
    assert y_g.shape == x_g.shape and y_g.dtype == x_g.dtype
    assert jnp.max(jnp.abs(y_cf - ref_cf)) < 1e-4
    assert jnp.max(jnp.abs(y_cl - ref_cl)) < 1e-4
    assert jnp.max(jnp.abs(y_g - ref_g)) < 1e-4

    print("KERNEL_OK")
</pallas_src>

<mosaic_0001>
module attributes {stable_mosaic.version = 11 : i64} {
  func.func @_ln_cfirst_kernel(%arg0: i32, %arg1: i32, %arg2: memref<1x4x256xf32, #tpu.memory_space<vmem>>, %arg3: memref<1x4x1xf32, #tpu.memory_space<vmem>>, %arg4: memref<1x4x1xf32, #tpu.memory_space<vmem>>, %arg5: memref<1x4x256xf32, #tpu.memory_space<vmem>>) attributes {dimension_semantics = [#tpu.dimension_semantics<parallel>, #tpu.dimension_semantics<parallel>], iteration_bounds = array<i64: 2, 1>, scalar_prefetch = 0 : i64, scratch_operands = 0 : i64, tpu.core_type = #tpu.core_type<tc>, window_params = [{transform_indices = @transform_0, window_bounds = array<i64: 1, 4, 256>}, {pipeline_mode = #tpu.pipeline_mode<synchronous>, transform_indices = @transform_1, window_bounds = array<i64: 1, 4, 1>}, {pipeline_mode = #tpu.pipeline_mode<synchronous>, transform_indices = @transform_2, window_bounds = array<i64: 1, 4, 1>}, {transform_indices = @transform_3, window_bounds = array<i64: 1, 4, 256>}]} {
    %c0 = arith.constant 0 : index
    %c0_0 = arith.constant 0 : index
    %c0_1 = arith.constant 0 : index
    %0 = vector.load %arg2[%c0, %c0_0, %c0_1] : memref<1x4x256xf32, #tpu.memory_space<vmem>>, vector<1x4x256xf32>
    %cst = arith.constant dense<0.000000e+00> : vector<1x256xf32>
    %1 = vector.multi_reduction <add>, %0, %cst [1] : vector<1x4x256xf32> to vector<1x256xf32>
    %2 = vector.shape_cast %1 : vector<1x256xf32> to vector<1x1x256xf32>
    %cst_2 = arith.constant 2.500000e-01 : f32
    %3 = vector.broadcast %cst_2 : f32 to vector<1x1x256xf32>
    %4 = arith.mulf %2, %3 : vector<1x1x256xf32>
    %5 = arith.mulf %0, %0 : vector<1x4x256xf32>
    %cst_3 = arith.constant dense<0.000000e+00> : vector<1x256xf32>
    %6 = vector.multi_reduction <add>, %5, %cst_3 [1] : vector<1x4x256xf32> to vector<1x256xf32>
    %7 = vector.shape_cast %6 : vector<1x256xf32> to vector<1x1x256xf32>
    %cst_4 = arith.constant 2.500000e-01 : f32
    %8 = vector.broadcast %cst_4 : f32 to vector<1x1x256xf32>
    %9 = arith.mulf %7, %8 : vector<1x1x256xf32>
    %10 = arith.mulf %4, %4 : vector<1x1x256xf32>
    %11 = arith.subf %9, %10 : vector<1x1x256xf32>
    %cst_5 = arith.constant 9.99999997E-7 : f32
    %12 = vector.broadcast %cst_5 : f32 to vector<1x1x256xf32>
    %13 = arith.addf %11, %12 : vector<1x1x256xf32>
    %14 = math.rsqrt %13 : vector<1x1x256xf32>
    %c0_6 = arith.constant 0 : index
    %c0_7 = arith.constant 0 : index
    %c0_8 = arith.constant 0 : index
    %15 = vector.load %arg3[%c0_6, %c0_7, %c0_8] : memref<1x4x1xf32, #tpu.memory_space<vmem>>, vector<1x4x1xf32>
    %c0_9 = arith.constant 0 : index
    %c0_10 = arith.constant 0 : index
    %c0_11 = arith.constant 0 : index
    %16 = vector.load %arg4[%c0_9, %c0_10, %c0_11] : memref<1x4x1xf32, #tpu.memory_space<vmem>>, vector<1x4x1xf32>
    %17 = vector.broadcast %14 : vector<1x1x256xf32> to vector<1x4x256xf32>
    %18 = vector.broadcast %15 : vector<1x4x1xf32> to vector<1x4x256xf32>
    %19 = arith.mulf %17, %18 : vector<1x4x256xf32>
    %20 = arith.mulf %0, %19 : vector<1x4x256xf32>
    %21 = vector.broadcast %4 : vector<1x1x256xf32> to vector<1x4x256xf32>
    %22 = arith.mulf %21, %19 : vector<1x4x256xf32>
    %23 = vector.broadcast %16 : vector<1x4x1xf32> to vector<1x4x256xf32>
    %24 = arith.subf %23, %22 : vector<1x4x256xf32>
    %25 = arith.addf %20, %24 : vector<1x4x256xf32>
    %c0_12 = arith.constant 0 : index
    %c0_13 = arith.constant 0 : index
    %c0_14 = arith.constant 0 : index
    %26 = vector.load %arg5[%c0_12, %c0_13, %c0_14] : memref<1x4x256xf32, #tpu.memory_space<vmem>>, vector<1x4x256xf32>
    tpu.vector_store %arg5[%c0_12, %c0_13, %c0_14], %25 {strides = array<i32>} : memref<1x4x256xf32, #tpu.memory_space<vmem>>, vector<1x4x256xf32>,
    return
  }
  func.func @transform_0(%arg0: i32, %arg1: i32) -> (i32, i32, i32) {
    %c0_i32 = arith.constant 0 : i32
    %c0_i32_0 = arith.constant 0 : i32
    return %arg0, %c0_i32, %arg1 : i32, i32, i32
  }
  func.func @transform_1(%arg0: i32, %arg1: i32) -> (i32, i32, i32) {
    %c0_i32 = arith.constant 0 : i32
    %c0_i32_0 = arith.constant 0 : i32
    %c0_i32_1 = arith.constant 0 : i32
    %c0_i32_2 = arith.constant 0 : i32
    return %c0_i32, %c0_i32_0, %c0_i32_1 : i32, i32, i32
  }
  func.func @transform_2(%arg0: i32, %arg1: i32) -> (i32, i32, i32) {
    %c0_i32 = arith.constant 0 : i32
    %c0_i32_0 = arith.constant 0 : i32
    %c0_i32_1 = arith.constant 0 : i32
    %c0_i32_2 = arith.constant 0 : i32
    return %c0_i32, %c0_i32_0, %c0_i32_1 : i32, i32, i32
  }
  func.func @transform_3(%arg0: i32, %arg1: i32) -> (i32, i32, i32) {
    %c0_i32 = arith.constant 0 : i32
    %c0_i32_0 = arith.constant 0 : i32
    return %arg0, %c0_i32, %arg1 : i32, i32, i32
  }
}

</mosaic_0001>

<llo_original>
// kernel: tpu_custom_call.1
$region0: #{tpu_custom_call.1}
  #allocation0 [shape = 'u32[]', space=smem, size = 0x4, offset = 0x4, fixed_abs, tag = 'smem constant byte address 0x4 - core index']
  #allocation1 [shape = 'u32[72,128]{1,0:T(1,128)}', space=vmem, size = 0x9000, scoped, tag = 'internal scratch']
  %s0 = inlined_call_operand.hbm [shape: f32[2,4,256], index: 0, kind: input, shape index: {}]
  %s1 = inlined_call_operand.vmem [shape: f32[1,4,1], index: 1, kind: input, shape index: {}]
  %s2 = inlined_call_operand.vmem [shape: f32[1,4,1], index: 2, kind: input, shape index: {}]
  %s3 = inlined_call_operand.hbm [shape: f32[2,4,256], index: 3, kind: output, shape index: {}]
  %s4 = sld [smem:[#allocation0]]
  $region49: #{tpu_custom_call.1} parent=0
    _
  %s6 = ssub.s32 1, %s4
  %s7 = scalar_select 0, %s6, %s4
  $region1: #{tpu_custom_call.1} parent=0
    #allocation2 [shape = 'u8[8192]{0}', space=vmem, size = 0x2000, scoped, tag = 'input window, operand 0']
    #allocation3 [shape = 's32[2]{0}', space=sflag, size = 0x8, scoped, tag = 'scoped memory for tpu_custom_call.1']
    #allocation4 [shape = 's32[2]{0}', space=sflag, size = 0x8, scoped, tag = 'scoped memory for tpu_custom_call.1']
    #allocation5 [shape = 'u8[8192]{0}', space=vmem, size = 0x2000, scoped, tag = 'output window, operand 0']
    %8 = vsyncpa [#allocation3], 0
    %s9 = scalar_lea.sflag [#allocation3], 1
    %10 = vsyncpa %s9, 0
    %11 = vsyncpa [#allocation4], 0
    %s12 = scalar_lea.sflag [#allocation4], 1
    %13 = vsyncpa %s12, 0
    loop: start=0, step=1, limit=4
    $region2: #{tpu_custom_call.1} parent=1 // loop_pre_header
      _
    $region3: #{tpu_custom_call.1} parent=1 // loop_header
      %s15 = sphi 0, %s19
      %p16 = scmp.ge.s32.totalorder %s15, 4
      %s22 = sphi 0, %s34
      %s23 = sphi 0, %s30
      %s24 = sphi 0, %s22
      %s25 = sphi 0, %s23
      %s26 = sphi 0, %s24
      %s27 = sphi 0, %s25
      %s39 = sphi 0, %s41
      %s42 = sphi 0, %s39
      %s43 = sphi 0, %s42
      %s59 = sphi 0, %s43
      %s63 = sphi 0, %s63
      %s65 = sphi 0, %s63
      %s66 = sphi 0, %s65
      %s80 = sphi 0, %s66
      %s84 = sphi 0, %s84
      %s86 = sphi 0, %s84
      %s87 = sphi 0, %s86
      %s101 = sphi 0, %s87
      %s109 = sphi 0, %s111
      %s112 = sphi 0, %s109
      %s113 = sphi 0, %s112
      %s129 = sphi 0, %s113
    $region4: #{tpu_custom_call.1} parent=1 // loop_header_branch
      %18 = sbr.rel (%p16) target = $region8
    $region5: #{tpu_custom_call.1} parent=1 // loop_body
      %s20 = ssub.s32 %s15, 1
      %s21 = ssub.s32 %s15, 2
      %s28 = sadd.s32 1, %s23
      %p29 = scmp.ge.s32.totalorder %s28, 1
      %s30 = scalar_select %p29, 0, %s28
      %s31 = sadd.s32 1, %s22
      %s32 = scalar_select %p29, %s31, %s22
      %p33 = scmp.ge.s32.totalorder %s32, 2
      %s34 = scalar_select %p33, 0, %s32
      %s35 = ssub.s32 %s22, %s34
      %s36 = ssub.s32 %s23, %s30
      %s37 = sor.u32 %s35, %s36
      %p38 = scmp.eq.s32.totalorder %s37, 0
      %s40 = sadd.s32 %s39, 1
      %s41 = scalar_select %p38, %s39, %s40
      %p44 = pneg %p38
      %p45 = scmp.eq.s32.totalorder %s15, 1
      %p46 = por %p44, %p45
      %p47 = scmp.ne.s32.totalorder %s39, %s42
      %p48 = scmp.eq.s32.totalorder %s15, 0
      %p49 = por %p47, %p48
      %p50 = scmp.ne.s32.totalorder %s39, %s42
      %p51 = scmp.eq.s32.totalorder %s20, 1
      %p52 = por %p50, %p51
      %p53 = scmp.ne.s32.totalorder %s42, %s43
      %p54 = scmp.eq.s32.totalorder %s20, 0
      %p55 = por %p53, %p54
      %p56 = scmp.ne.s32.totalorder %s42, %s43
      %p57 = scmp.eq.s32.totalorder %s21, 1
      %p58 = por %p56, %p57
      %p60 = scmp.ne.s32.totalorder %s43, %s59
      %p61 = scmp.eq.s32.totalorder %s21, 0
      %p62 = por %p60, %p61
      %s64 = sadd.s32 %s63, 1
      %p67 = scmp.eq.s32.totalorder %s15, 1
      %p68 = scmp.ne.s32.totalorder %s63, %s65
      %p69 = scmp.eq.s32.totalorder %s15, 0
      %p70 = por %p68, %p69
      %p71 = scmp.ne.s32.totalorder %s63, %s65
      %p72 = scmp.eq.s32.totalorder %s20, 1
      %p73 = por %p71, %p72
      %p74 = scmp.ne.s32.totalorder %s65, %s66
      %p75 = scmp.eq.s32.totalorder %s20, 0
      %p76 = por %p74, %p75
      %p77 = scmp.ne.s32.totalorder %s65, %s66
      %p78 = scmp.eq.s32.totalorder %s21, 1
      %p79 = por %p77, %p78
      %p81 = scmp.ne.s32.totalorder %s66, %s80
      %p82 = scmp.eq.s32.totalorder %s21, 0
      %p83 = por %p81, %p82
      %s85 = sadd.s32 %s84, 1
      %p88 = scmp.eq.s32.totalorder %s15, 1
      %p89 = scmp.ne.s32.totalorder %s84, %s86
      %p90 = scmp.eq.s32.totalorder %s15, 0
      %p91 = por %p89, %p90
      %p92 = scmp.ne.s32.totalorder %s84, %s86
      %p93 = scmp.eq.s32.totalorder %s20, 1
      %p94 = por %p92, %p93
      %p95 = scmp.ne.s32.totalorder %s86, %s87
      %p96 = scmp.eq.s32.totalorder %s20, 0
      %p97 = por %p95, %p96
      %p98 = scmp.ne.s32.totalorder %s86, %s87
      %p99 = scmp.eq.s32.totalorder %s21, 1
      %p100 = por %p98, %p99
      %p102 = scmp.ne.s32.totalorder %s87, %s101
      %p103 = scmp.eq.s32.totalorder %s21, 0
      %p104 = por %p102, %p103
      %s105 = ssub.s32 %s22, %s34
      %s106 = ssub.s32 %s23, %s30
      %s107 = sor.u32 %s105, %s106
      %p108 = scmp.eq.s32.totalorder %s107, 0
      %s110 = sadd.s32 %s109, 1
      %s111 = scalar_select %p108, %s109, %s110
      %p114 = pneg %p108
      %p115 = scmp.eq.s32.totalorder %s15, 1
      %p116 = por %p114, %p115
      %p117 = scmp.ne.s32.totalorder %s109, %s112
      %p118 = scmp.eq.s32.totalorder %s15, 0
      %p119 = por %p117, %p118
      %p120 = scmp.ne.s32.totalorder %s109, %s112
      %p121 = scmp.eq.s32.totalorder %s20, 1
      %p122 = por %p120, %p121
      %p123 = scmp.ne.s32.totalorder %s112, %s113
      %p124 = scmp.eq.s32.totalorder %s20, 0
      %p125 = por %p123, %p124
      %p126 = scmp.ne.s32.totalorder %s112, %s113
      %p127 = scmp.eq.s32.totalorder %s21, 1
      %p128 = por %p126, %p127
      %p130 = scmp.ne.s32.totalorder %s113, %s129
      %p131 = scmp.eq.s32.totalorder %s21, 0
      %p132 = por %p130, %p131
      %p133 = scmp.le.s32.totalorder 1, %s15
      %p134 = scmp.lt.s32.totalorder %s15, 3
      %p135 = pnand %p133, %p134
      %p136 = pneg %p135
      // Predicated region
      $region9: #{tpu_custom_call.1} parent=5 // pred_check
        _
      $region10: #{tpu_custom_call.1} parent=5 // pred_check_branch
        %138 = sbr.rel (%p135) target = $region12
      $region11: #{tpu_custom_call.1} parent=5 // pred_region
        %s139 = ssub.s32 %s15, 1
        // Predicated region
        $region13: #{tpu_custom_call.1} parent=11 // pred_check
          %p140 = pneg %p76
        $region14: #{tpu_custom_call.1} parent=11 // pred_check_branch
          %142 = sbr.rel (%p140) target = $region16
        $region15: #{tpu_custom_call.1} parent=11 // pred_region
          _
        $region16: #{tpu_custom_call.1} parent=11 // pred_fallthru
          _
        // Predicated region
        $region17: #{tpu_custom_call.1} parent=11 // pred_check
          %p143 = pneg %p97
        $region18: #{tpu_custom_call.1} parent=11 // pred_check_branch
          %145 = sbr.rel (%p143) target = $region20
        $region19: #{tpu_custom_call.1} parent=11 // pred_region
          _
        $region20: #{tpu_custom_call.1} parent=11 // pred_fallthru
          _
      $region12: #{tpu_custom_call.1} parent=5 // pred_fallthru
        _
      %p146 = scmp.lt.s32.totalorder %s15, 2
      // Predicated region
      $region21: #{tpu_custom_call.1} parent=5 // pred_check
        %p147 = pneg %p146
      $region22: #{tpu_custom_call.1} parent=5 // pred_check_branch
        %149 = sbr.rel (%p147) target = $region24
      $region23: #{tpu_custom_call.1} parent=5 // pred_region
        // Predicated region
        $region25: #{tpu_custom_call.1} parent=23 // pred_check
          %p150 = pneg %p49
        $region26: #{tpu_custom_call.1} parent=23 // pred_check_branch
          %152 = sbr.rel (%p150) target = $region28
        $region27: #{tpu_custom_call.1} parent=23 // pred_region
          %s153 = sand.u32 %s39, 1
          %s154 = scalar_lea.sflag [#allocation3], %s153
          %s155 = sand.u32 %s39, 1
          %s156 = smul.addr %s155, 8
          %s157 = scalar_lea.vmem [#allocation2], %s156
          %s158 = smul.u32 2, %s23
          %160 = vsyncadd %s154, 0
          %s161 = smul.addr %s22, 2
          %s162 = sadd.s32 %s158, %s161
          %s163 = smul.addr %s162, 4
          %s164 = scalar_lea.hbm %s0, %s163
          %s166 = sshll.u32 %s164, 4
          %s167 = int_to_ptr.hbm [resolvable:$true] %s166
          %s168 = sshll.u32 %s157, 4
          %s169 = int_to_ptr.vmem [resolvable:$true] %s168
          %171 = dma.hbm_to_vmem [thread:$0]  %s167, 128, %s169, %s154
        $region28: #{tpu_custom_call.1} parent=23 // pred_fallthru
          _
      $region24: #{tpu_custom_call.1} parent=5 // pred_fallthru
        _
      %p172 = scmp.le.s32.totalorder 1, %s15
      %p173 = scmp.lt.s32.totalorder %s15, 3
      %p174 = pnand %p172, %p173
      %p175 = pneg %p174
      // Predicated region
      $region29: #{tpu_custom_call.1} parent=5 // pred_check
        _
      $region30: #{tpu_custom_call.1} parent=5 // pred_check_branch
        %177 = sbr.rel (%p174) target = $region32
      $region31: #{tpu_custom_call.1} parent=5 // pred_region
        %s178 = ssub.s32 %s15, 1
        %s179 = sand.u32 %s42, 1
        %s180 = scalar_lea.sflag [#allocation3], %s179
        %s181 = sand.u32 %s42, 1
        %s182 = smul.addr %s181, 8
        %s183 = scalar_lea.vmem [#allocation2], %s182
        // Predicated region
        $region33: #{tpu_custom_call.1} parent=31 // pred_check
          %p184 = pneg %p55
        $region34: #{tpu_custom_call.1} parent=31 // pred_check_branch
          %186 = sbr.rel (%p184) target = $region36
        $region35: #{tpu_custom_call.1} parent=31 // pred_region
          %188 = dma.done %s180, 128
        $region36: #{tpu_custom_call.1} parent=31 // pred_fallthru
          _
        %s189 = sand.u32 %s42, 1
        %s190 = scalar_lea.sflag [#allocation3], %s189
        %s191 = sand.u32 %s42, 1
        %s192 = smul.addr %s191, 8
        %s193 = scalar_lea.vmem [#allocation2], %s192
        %p194 = pneg %p55
        %p195 = pneg %p52
        %p196 = pneg %p76
        %p197 = pneg %p73
        %p198 = pneg %p97
        %p199 = pneg %p94
        %p200 = pneg %p125
        %p201 = pneg %p122
        %s202 = sand.u32 %s112, 1
        %s203 = scalar_lea.sflag [#allocation4], %s202
        %s204 = sand.u32 %s112, 1
        %s205 = smul.addr %s204, 8
        %s206 = scalar_lea.vmem [#allocation5], %s205
        %s207 = smul.u32 2, %s25
        %s208 = smul.u32 2, %s25
        %v209 = vld [vmem:[%s183] sm:$0xff]
        %211 = vst [vmem:[#allocation1] ss:$2 sm:$0xff] %v209
        %v212 = vld.sshfl [vmem:[#allocation1] sm:$0xff pattern:$0x75316420]
        %v213 = vld.sshfl [vmem:[#allocation1 + $0x8] sm:$0xff pattern:$0x75316420]
        %vm216 = vcmask 1043456
        %v217 = vsel %vm216, %v212, 0.0
        %v218 = vrot.slane %v217, 4
        %v219 = vadd.f32 %v217, %v218
        %v220 = vrot.slane %v219, 2
        %v221 = vadd.f32 %v219, %v220
        %v222 = vrot.slane %v221, 1
        %v223 = vadd.f32 %v221, %v222
        %v224 = vsel %vm216, %v213, 0.0
        %v225 = vrot.slane %v224, 4
        %v226 = vadd.f32 %v224, %v225
        %v227 = vrot.slane %v226, 2
        %v228 = vadd.f32 %v226, %v227
        %v229 = vrot.slane %v228, 1
        %v230 = vadd.f32 %v228, %v229
        %v231 = vmul.f32 %v223, 0.25
        %v232 = vmul.f32 %v230, 0.25
        %v233 = vmul.f32 %v209, %v209
        %235 = vst [vmem:[#allocation1] ss:$2 sm:$0xff] %v233
        %v236 = vld.sshfl [vmem:[#allocation1] sm:$0xff pattern:$0x75316420]
        %v237 = vld.sshfl [vmem:[#allocation1 + $0x8] sm:$0xff pattern:$0x75316420]
        %v240 = vsel %vm216, %v236, 0.0
        %v241 = vrot.slane %v240, 4
        %v242 = vadd.f32 %v240, %v241
        %v243 = vrot.slane %v242, 2
        %v244 = vadd.f32 %v242, %v243
        %v245 = vrot.slane %v244, 1
        %v246 = vadd.f32 %v244, %v245
        %v247 = vsel %vm216, %v237, 0.0
        %v248 = vrot.slane %v247, 4
        %v249 = vadd.f32 %v247, %v248
        %v250 = vrot.slane %v249, 2
        %v251 = vadd.f32 %v249, %v250
        %v252 = vrot.slane %v251, 1
        %v253 = vadd.f32 %v251, %v252
        %v254 = vmul.f32 %v246, 0.25
        %v255 = vmul.f32 %v253, 0.25
        %v256 = vmul.f32 %v231, %v231
        %v257 = vmul.f32 %v232, %v232
        %v258 = vsub.f32 %v254, %v256
        %v259 = vsub.f32 %v255, %v257
        %v260 = vadd.f32 %v258, 1e-06
        %v261 = vadd.f32 %v259, 1e-06
        %v262 = vrsqrt.pop %v260
        %v263 = vmul.f32 %v262, %v260
        %v264 = vmul.f32 %v263, %v262
        %v265 = vmul.f32 0.5, %v264
        %v266 = vsub.f32 1.5, %v265
        %v267 = vmul.f32 %v262, %v266
        %vm268 = vweird.f32 %v260
        %vm269 = vweird.f32 %v262
        %vm270 = vmor %vm268, %vm269
        %v271 = vsel %vm270, %v262, %v267
        %v272 = vrsqrt.pop %v261
        %v273 = vmul.f32 %v272, %v261
        %v274 = vmul.f32 %v273, %v272
        %v275 = vmul.f32 0.5, %v274
        %v276 = vsub.f32 1.5, %v275
        %v277 = vmul.f32 %v272, %v276
        %vm278 = vweird.f32 %v261
        %vm279 = vweird.f32 %v272
        %vm280 = vmor %vm278, %vm279
        %v281 = vsel %vm280, %v272, %v277
        %v282 = vld [vmem:[%s1] sm:$0xf]
        %v283 = vld [vmem:[%s2] sm:$0xf]
        %285 = vset.pattern.permute.xlu0 0
        %286 = vperm.xlu0 %285, %v282
        %v287 = vpop.permute.xlu0 %286
        %v289 = vmul.f32 %v271, %v287
        %v290 = vmul.f32 %v281, %v287
        %v293 = vrot.slane %v290, 4
        %v294 = vsel %vm216, %v289, %v293
        %v296 = vmul.f32 %v209, %v294
        %v297 = vmul.f32 %v231, %v289
        %v298 = vmul.f32 %v232, %v290
        %300 = vset.pattern.permute.xlu0 0
        %301 = vperm.xlu0 %300, %v283
        %v302 = vpop.permute.xlu0 %301
        %v304 = vsub.f32 %v302, %v297
        %v305 = vsub.f32 %v302, %v298
        %v308 = vrot.slane %v305, 4
        %v309 = vsel %vm216, %v304, %v308
        %v311 = vadd.f32 %v296, %v309
        %312 = vst [vmem:[%s206] sm:$0xff] %v311
        %s313 = sand.u32 %s112, 1
        %s314 = scalar_lea.sflag [#allocation4], %s313
        %s315 = sand.u32 %s112, 1
        %s316 = smul.addr %s315, 8
        %s317 = scalar_lea.vmem [#allocation5], %s316
        // Predicated region
        $region37: #{tpu_custom_call.1} parent=31 // pred_check
          %p318 = pneg %p122
        $region38: #{tpu_custom_call.1} parent=31 // pred_check_branch
          %320 = sbr.rel (%p318) target = $region40
        $region39: #{tpu_custom_call.1} parent=31 // pred_region
          %s321 = smul.u32 2, %s25
          %323 = vsyncadd %s314, 0
          %s324 = smul.addr %s24, 2
          %s325 = sadd.s32 %s321, %s324
          %s326 = smul.addr %s325, 4
          %s327 = scalar_lea.hbm %s3, %s326
          %s329 = sshll.u32 %s317, 4
          %s330 = int_to_ptr.vmem [resolvable:$true] %s329
          %s331 = sshll.u32 %s327, 4
          %s332 = int_to_ptr.hbm [resolvable:$true] %s331
          %334 = dma.vmem_to_hbm [thread:$0]  %s330, 128, %s332, %s314
        $region40: #{tpu_custom_call.1} parent=31 // pred_fallthru
          _
      $region32: #{tpu_custom_call.1} parent=5 // pred_fallthru
        _
      %p335 = scmp.le.s32.totalorder 2, %s15
      // Predicated region
      $region41: #{tpu_custom_call.1} parent=5 // pred_check
        %p336 = pneg %p335
      $region42: #{tpu_custom_call.1} parent=5 // pred_check_branch
        %338 = sbr.rel (%p336) target = $region44
      $region43: #{tpu_custom_call.1} parent=5 // pred_region
        %s339 = ssub.s32 %s15, 2
        // Predicated region
        $region45: #{tpu_custom_call.1} parent=43 // pred_check
          %p340 = pneg %p128
        $region46: #{tpu_custom_call.1} parent=43 // pred_check_branch
          %342 = sbr.rel (%p340) target = $region48
        $region47: #{tpu_custom_call.1} parent=43 // pred_region
          %s343 = sand.u32 %s113, 1
          %s344 = scalar_lea.sflag [#allocation4], %s343
          %s345 = sand.u32 %s113, 1
          %s346 = smul.addr %s345, 8
          %s347 = scalar_lea.vmem [#allocation5], %s346
          %349 = dma.done %s344, 128
        $region48: #{tpu_custom_call.1} parent=43 // pred_fallthru
          _
      $region44: #{tpu_custom_call.1} parent=5 // pred_fallthru
        _
    $region6: #{tpu_custom_call.1} parent=1 // loop_footer
      %s19 = sadd.s32 1, %s15
    $region7: #{tpu_custom_call.1} parent=1 // loop_footer_branch
      %14 = sbr.rel target = $region3
    $region8: #{tpu_custom_call.1} parent=1 // loop_exit
      _
    %350 = vsyncpa [#allocation3], 1
    %s351 = scalar_lea.sflag [#allocation3], 1
    %352 = vsyncpa %s351, 1
    %353 = vsyncpa [#allocation4], 1
    %s354 = scalar_lea.sflag [#allocation4], 1
    %355 = vsyncpa %s354, 1

</llo_original>
